<compile_context>
chip_gen: v5e
topology: v5e:2x2
jax: 0.10.0
libtpu: 0.0.40
codegen_flags: <defaults>
</compile_context>

<pallas_src>
import functools

import jax
import jax.numpy as jnp
from jax.experimental import pallas as pl
from jax.experimental.pallas import tpu as pltpu


# ---------------------------------------------------------------------------
# Pallas kernel: one BasicBlock forward for all images, (N*C, H*W) layout.
# ---------------------------------------------------------------------------
def basic_block_kernel(x_ref, m_ref, dw1_ref, pw1_ref, b1_ref, dw2_ref,
                       wcat_ref, bf_ref, o_ref, *, H, W):
    HW = H * W
    x = x_ref[...]                               # (N*Cin, HW), images stacked on sublanes
    m = m_ref[...]                               # (4, HW) {0,1} masks
    ml, mr, mt, mb = m[0:1], m[1:2], m[2:3], m[3:4]

    def dwconv3x3(a, dw):
        """Depthwise 3x3, stride 1, pad 1, on a (C, H*W) activation.

        dw is (C, 9), taps in row-major (ky*3+kx) order.  Factored form:
          s_ky[f]    = a[f + (ky-1)*W]                 (lane roll by +-W, row-masked)
          part_kx[f] = sum_ky dw[:, ky*3+kx] * s_ky[f]
          out[f]     = part_1[f] + part_0[f-1]*ml[f] + part_2[f+1]*mr[f]
        Lane rolls wrap around; the wrapped lanes are exactly the ones the
        row / column masks zero out, so no halo buffer is needed.
        """
        s_up = pltpu.roll(a, W, 1) * mt          # a[f - W] (row above), 0 on first row
        s_dn = pltpu.roll(a, HW - W, 1) * mb     # a[f + W] (row below), 0 on last row
        rows = (s_up, a, s_dn)
        parts = []
        for kx in range(3):
            p = None
            for ky in range(3):
                tap = dw[:, ky * 3 + kx: ky * 3 + kx + 1]    # (C, 1)
                term = tap * rows[ky]
                p = term if p is None else p + term          # first tap seeds the acc
            parts.append(p)
        out = parts[1]
        out = out + pltpu.roll(parts[0], 1, 1) * ml          # contribution of column x-1
        out = out + pltpu.roll(parts[2], HW - 1, 1) * mr     # contribution of column x+1
        return out

    # ---- DepthSepConv #1: depthwise 3x3 -> pointwise 1x1 (BN1 folded) -> ReLU ----
    acc1 = dwconv3x3(x, dw1_ref[...])                                     # (N*Cin, HW)
    h1 = jnp.dot(pw1_ref[...], acc1, preferred_element_type=jnp.float32)  # (N*Cout, HW)
    h1 = jnp.maximum(h1 + b1_ref[...], 0.0)

    # ---- DepthSepConv #2 (BN2 folded) fused with downsample 1x1 (BNd folded) ----
    acc2 = dwconv3x3(h1, dw2_ref[...])                                    # (N*Cout, HW)
    rhs = jnp.concatenate([acc2, x], axis=0)                              # (N*(Cout+Cin), HW)
    z = jnp.dot(wcat_ref[...], rhs, preferred_element_type=jnp.float32) + bf_ref[...]
    o_ref[...] = jnp.maximum(z, 0.0).astype(o_ref.dtype)                  # lane-dense store


# ---------------------------------------------------------------------------
# Wrapper: NCHW in / NCHW out, no transposes, single pallas_call invocation.
# ---------------------------------------------------------------------------
def basic_block_forward(x_nchw, kp):
    """BasicBlock forward (stride=1, inference BN). (N,Cin,H,W) -> (N,Cout,H,W)."""
    N, Cin, H, W = x_nchw.shape
    NCout = kp["pw1_bd"].shape[0]
    Cout = NCout // N
    HW = H * W

    x2 = x_nchw.reshape(N * Cin, HW)             # free reshape of contiguous NCHW

    # {0,1} edge masks, stacked into a single (4, HW) input: [ml, mr, mt, mb].
    idx = jnp.arange(HW, dtype=jnp.int32)
    col = idx % W
    masks = jnp.stack([
        (col >= 1),          # valid to read column x-1
        (col <= W - 2),      # valid to read column x+1
        (idx >= W),          # valid to read row    y-1
        (idx < HW - W),      # valid to read row    y+1
    ]).astype(x_nchw.dtype)

    kernel = functools.partial(basic_block_kernel, H=H, W=W)

    out = pl.pallas_call(
        kernel,
        out_shape=jax.ShapeDtypeStruct((NCout, HW), x_nchw.dtype),
    )(x2, masks, kp["dw1"], kp["pw1_bd"], kp["b1"], kp["dw2"], kp["wcat"], kp["bf"])

    return out.reshape(N, Cout, H, W)


# ---------------- deterministic parameter init (PyTorch layouts) ----------------
def init_raw_params(key, cin, cout):
    ks = jax.random.split(key, 8)

    def rn(k, shape, scale=0.3):
        return scale * jax.random.normal(k, shape, jnp.float32)

    def bn(k):
        k0, k1, k2, k3 = jax.random.split(k, 4)
        gamma = 1.0 + 0.1 * jax.random.normal(k0, (cout,), jnp.float32)
        beta = 0.1 * jax.random.normal(k1, (cout,), jnp.float32)
        mean = 0.1 * jax.random.normal(k2, (cout,), jnp.float32)
        var = 0.5 + jnp.abs(jax.random.normal(k3, (cout,), jnp.float32))
        return (gamma, beta, mean, var)

    return dict(
        conv1_dw=rn(ks[0], (cin, 1, 3, 3)),        # depthwise, groups=cin, no bias
        conv1_pw=rn(ks[1], (cout, cin, 1, 1)),     # pointwise, no bias
        bn1=bn(ks[2]),
        conv2_dw=rn(ks[3], (cout, 1, 3, 3)),
        conv2_pw=rn(ks[4], (cout, cout, 1, 1)),
        bn2=bn(ks[5]),
        down_w=rn(ks[6], (cout, cin, 1, 1)),       # downsample 1x1, no bias
        bnd=bn(ks[7]),
    )


def to_kernel_params(raw, n_batch, eps=1e-5):
    """Fold inference BN into the 1x1 weights and build the batched (sublane-stacked)
    per-channel taps, block-diagonal pointwise weights and fused final weight/bias."""
    def fold(bn_params):
        g, b, m, v = bn_params
        s = g / jnp.sqrt(v + eps)
        return s, b - m * s

    s1, b1 = fold(raw["bn1"])
    s2, b2 = fold(raw["bn2"])
    sd, bd = fold(raw["bnd"])

    cin = raw["conv1_dw"].shape[0]
    cout = raw["conv2_dw"].shape[0]
    dw1 = raw["conv1_dw"][:, 0].reshape(cin, 9)              # per-channel taps
    dw2 = raw["conv2_dw"][:, 0].reshape(cout, 9)
    pw1 = s1[:, None] * raw["conv1_pw"][:, :, 0, 0]          # (Cout, Cin), BN1 folded
    pw2 = s2[:, None] * raw["conv2_pw"][:, :, 0, 0]          # (Cout, Cout), BN2 folded
    wd = sd[:, None] * raw["down_w"][:, :, 0, 0]             # (Cout, Cin),  BNd folded
    bf = b2 + bd                                             # shared final bias

    eye = jnp.eye(n_batch, dtype=jnp.float32)
    return dict(
        dw1=jnp.tile(dw1, (n_batch, 1)),                     # (N*Cin, 9)
        pw1_bd=jnp.kron(eye, pw1),                           # (N*Cout, N*Cin) block-diag
        b1=jnp.tile(b1, n_batch)[:, None],                   # (N*Cout, 1)
        dw2=jnp.tile(dw2, (n_batch, 1)),                     # (N*Cout, 9)
        wcat=jnp.concatenate([jnp.kron(eye, pw2),            # (N*Cout, N*(Cout+Cin))
                              jnp.kron(eye, wd)], axis=1),
        bf=jnp.tile(bf, n_batch)[:, None],                   # (N*Cout, 1)
    )


# ---------------- pure-JAX reference (NCHW, lax convs) ----------------
def ref_forward(x, rp, eps=1e-5):
    def conv(y, w, pad, groups=1):
        return jax.lax.conv_general_dilated(
            y, w, (1, 1), [(pad, pad), (pad, pad)],
            dimension_numbers=("NCHW", "OIHW", "NCHW"),
            feature_group_count=groups,
            precision=jax.lax.Precision.HIGHEST)

    def bn(y, p):
        g, b, m, v = p
        sh = (1, -1, 1, 1)
        return (y - m.reshape(sh)) / jnp.sqrt(v.reshape(sh) + eps) * g.reshape(sh) + b.reshape(sh)

    out = conv(x, rp["conv1_dw"], pad=1, groups=x.shape[1])
    out = conv(out, rp["conv1_pw"], pad=0)
    out = jax.nn.relu(bn(out, rp["bn1"]))
    out = conv(out, rp["conv2_dw"], pad=1, groups=out.shape[1])
    out = conv(out, rp["conv2_pw"], pad=0)
    out = bn(out, rp["bn2"])
    ident = bn(conv(x, rp["down_w"], pad=0), rp["bnd"])
    return jax.nn.relu(out + ident)


if __name__ == "__main__":
    key = jax.random.PRNGKey(0)
    k_x, k_p = jax.random.split(key)

    N, Cin, H, W = 2, 4, 16, 16      # inplanes=4
    Cout = 8                         # planes=8 (!= inplanes -> downsample branch active)

    x = jax.random.normal(k_x, (N, Cin, H, W), jnp.float32)
    raw = init_raw_params(k_p, Cin, Cout)
    kp = to_kernel_params(raw, N)

    out = jax.block_until_ready(basic_block_forward(x, kp))
    ref = ref_forward(x, raw)

    assert out.shape == (N, Cout, H, W), out.shape
    max_err = float(jnp.max(jnp.abs(out - ref)))
    assert jnp.allclose(out, ref, rtol=1e-4, atol=1e-4), max_err

    print("KERNEL_OK")
</pallas_src>

<mosaic_0001>
module attributes {stable_mosaic.version = 11 : i64} {
  func.func @basic_block_kernel(%arg0: memref<8x256xf32, #tpu.memory_space<vmem>>, %arg1: memref<4x256xf32, #tpu.memory_space<vmem>>, %arg2: memref<8x9xf32, #tpu.memory_space<vmem>>, %arg3: memref<16x8xf32, #tpu.memory_space<vmem>>, %arg4: memref<16x1xf32, #tpu.memory_space<vmem>>, %arg5: memref<16x9xf32, #tpu.memory_space<vmem>>, %arg6: memref<16x24xf32, #tpu.memory_space<vmem>>, %arg7: memref<16x1xf32, #tpu.memory_space<vmem>>, %arg8: memref<16x256xf32, #tpu.memory_space<vmem>>) attributes {dimension_semantics = [], scalar_prefetch = 0 : i64, scratch_operands = 0 : i64, tpu.core_type = #tpu.core_type<tc>} {
    %c0 = arith.constant 0 : index
    %c0_0 = arith.constant 0 : index
    %0 = vector.load %arg0[%c0, %c0_0] : memref<8x256xf32, #tpu.memory_space<vmem>>, vector<8x256xf32>
    %c0_1 = arith.constant 0 : index
    %c0_2 = arith.constant 0 : index
    %1 = vector.load %arg1[%c0_1, %c0_2] : memref<4x256xf32, #tpu.memory_space<vmem>>, vector<4x256xf32>
    %2 = vector.extract_strided_slice %1 {offsets = [0, 0], sizes = [1, 256], strides = [1, 1]} : vector<4x256xf32> to vector<1x256xf32>
    %3 = vector.extract_strided_slice %1 {offsets = [1, 0], sizes = [1, 256], strides = [1, 1]} : vector<4x256xf32> to vector<1x256xf32>
    %4 = vector.extract_strided_slice %1 {offsets = [2, 0], sizes = [1, 256], strides = [1, 1]} : vector<4x256xf32> to vector<1x256xf32>
    %5 = vector.extract_strided_slice %1 {offsets = [3, 0], sizes = [1, 256], strides = [1, 1]} : vector<4x256xf32> to vector<1x256xf32>
    %c0_3 = arith.constant 0 : index
    %c0_4 = arith.constant 0 : index
    %6 = vector.load %arg2[%c0_3, %c0_4] : memref<8x9xf32, #tpu.memory_space<vmem>>, vector<8x9xf32>
    %c16_i32 = arith.constant 16 : i32
    %7 = tpu.dynamic_rotate %0 by %c16_i32 dim 1 : vector<8x256xf32>, i32 -> vector<8x256xf32>
    %8 = vector.broadcast %4 : vector<1x256xf32> to vector<8x256xf32>
    %9 = arith.mulf %7, %8 : vector<8x256xf32>
    %c240_i32 = arith.constant 240 : i32
    %10 = tpu.dynamic_rotate %0 by %c240_i32 dim 1 : vector<8x256xf32>, i32 -> vector<8x256xf32>
    %11 = vector.broadcast %5 : vector<1x256xf32> to vector<8x256xf32>
    %12 = arith.mulf %10, %11 : vector<8x256xf32>
    %13 = vector.extract_strided_slice %6 {offsets = [0, 0], sizes = [8, 1], strides = [1, 1]} : vector<8x9xf32> to vector<8x1xf32>
    %14 = vector.broadcast %13 : vector<8x1xf32> to vector<8x256xf32>
    %15 = arith.mulf %14, %9 : vector<8x256xf32>
    %16 = vector.extract_strided_slice %6 {offsets = [0, 3], sizes = [8, 1], strides = [1, 1]} : vector<8x9xf32> to vector<8x1xf32>
    %17 = vector.broadcast %16 : vector<8x1xf32> to vector<8x256xf32>
    %18 = arith.mulf %17, %0 : vector<8x256xf32>
    %19 = arith.addf %15, %18 : vector<8x256xf32>
    %20 = vector.extract_strided_slice %6 {offsets = [0, 6], sizes = [8, 1], strides = [1, 1]} : vector<8x9xf32> to vector<8x1xf32>
    %21 = vector.broadcast %20 : vector<8x1xf32> to vector<8x256xf32>
    %22 = arith.mulf %21, %12 : vector<8x256xf32>
    %23 = arith.addf %19, %22 : vector<8x256xf32>
    %24 = vector.extract_strided_slice %6 {offsets = [0, 1], sizes = [8, 1], strides = [1, 1]} : vector<8x9xf32> to vector<8x1xf32>
    %25 = vector.broadcast %24 : vector<8x1xf32> to vector<8x256xf32>
    %26 = arith.mulf %25, %9 : vector<8x256xf32>
    %27 = vector.extract_strided_slice %6 {offsets = [0, 4], sizes = [8, 1], strides = [1, 1]} : vector<8x9xf32> to vector<8x1xf32>
    %28 = vector.broadcast %27 : vector<8x1xf32> to vector<8x256xf32>
    %29 = arith.mulf %28, %0 : vector<8x256xf32>
    %30 = arith.addf %26, %29 : vector<8x256xf32>
    %31 = vector.extract_strided_slice %6 {offsets = [0, 7], sizes = [8, 1], strides = [1, 1]} : vector<8x9xf32> to vector<8x1xf32>
    %32 = vector.broadcast %31 : vector<8x1xf32> to vector<8x256xf32>
    %33 = arith.mulf %32, %12 : vector<8x256xf32>
    %34 = arith.addf %30, %33 : vector<8x256xf32>
    %35 = vector.extract_strided_slice %6 {offsets = [0, 2], sizes = [8, 1], strides = [1, 1]} : vector<8x9xf32> to vector<8x1xf32>
    %36 = vector.broadcast %35 : vector<8x1xf32> to vector<8x256xf32>
    %37 = arith.mulf %36, %9 : vector<8x256xf32>
    %38 = vector.extract_strided_slice %6 {offsets = [0, 5], sizes = [8, 1], strides = [1, 1]} : vector<8x9xf32> to vector<8x1xf32>
    %39 = vector.broadcast %38 : vector<8x1xf32> to vector<8x256xf32>
    %40 = arith.mulf %39, %0 : vector<8x256xf32>
    %41 = arith.addf %37, %40 : vector<8x256xf32>
    %42 = vector.extract_strided_slice %6 {offsets = [0, 8], sizes = [8, 1], strides = [1, 1]} : vector<8x9xf32> to vector<8x1xf32>
    %43 = vector.broadcast %42 : vector<8x1xf32> to vector<8x256xf32>
    %44 = arith.mulf %43, %12 : vector<8x256xf32>
    %45 = arith.addf %41, %44 : vector<8x256xf32>
    %c1_i32 = arith.constant 1 : i32
    %46 = tpu.dynamic_rotate %23 by %c1_i32 dim 1 : vector<8x256xf32>, i32 -> vector<8x256xf32>
    %47 = vector.broadcast %2 : vector<1x256xf32> to vector<8x256xf32>
    %48 = arith.mulf %46, %47 : vector<8x256xf32>
    %49 = arith.addf %34, %48 : vector<8x256xf32>
    %c255_i32 = arith.constant 255 : i32
    %50 = tpu.dynamic_rotate %45 by %c255_i32 dim 1 : vector<8x256xf32>, i32 -> vector<8x256xf32>
    %51 = vector.broadcast %3 : vector<1x256xf32> to vector<8x256xf32>
    %52 = arith.mulf %50, %51 : vector<8x256xf32>
    %53 = arith.addf %49, %52 : vector<8x256xf32>
    %c0_5 = arith.constant 0 : index
    %c0_6 = arith.constant 0 : index
    %54 = vector.load %arg3[%c0_5, %c0_6] : memref<16x8xf32, #tpu.memory_space<vmem>>, vector<16x8xf32>
    %cst = arith.constant dense<0.000000e+00> : vector<16x256xf32>
    %55 = tpu.matmul %54, %53, %cst {dimension_numbers = #tpu.dot_dimension_numbers<[1], [0], [0], [1], [0, 0, 1, 1], [], []>} : vector<16x8xf32>, vector<8x256xf32>, vector<16x256xf32> -> vector<16x256xf32>
    %c0_7 = arith.constant 0 : index
    %c0_8 = arith.constant 0 : index
    %56 = vector.load %arg4[%c0_7, %c0_8] : memref<16x1xf32, #tpu.memory_space<vmem>>, vector<16x1xf32>
    %57 = vector.broadcast %56 : vector<16x1xf32> to vector<16x256xf32>
    %58 = arith.addf %55, %57 : vector<16x256xf32>
    %cst_9 = arith.constant 0.000000e+00 : f32
    %59 = vector.broadcast %cst_9 : f32 to vector<16x256xf32>
    %60 = arith.maximumf %58, %59 : vector<16x256xf32>
    %c0_10 = arith.constant 0 : index
    %c0_11 = arith.constant 0 : index
    %61 = vector.load %arg5[%c0_10, %c0_11] : memref<16x9xf32, #tpu.memory_space<vmem>>, vector<16x9xf32>
    %c16_i32_12 = arith.constant 16 : i32
    %62 = tpu.dynamic_rotate %60 by %c16_i32_12 dim 1 : vector<16x256xf32>, i32 -> vector<16x256xf32>
    %63 = vector.broadcast %4 : vector<1x256xf32> to vector<16x256xf32>
    %64 = arith.mulf %62, %63 : vector<16x256xf32>
    %c240_i32_13 = arith.constant 240 : i32
    %65 = tpu.dynamic_rotate %60 by %c240_i32_13 dim 1 : vector<16x256xf32>, i32 -> vector<16x256xf32>
    %66 = vector.broadcast %5 : vector<1x256xf32> to vector<16x256xf32>
    %67 = arith.mulf %65, %66 : vector<16x256xf32>
    %68 = vector.extract_strided_slice %61 {offsets = [0, 0], sizes = [16, 1], strides = [1, 1]} : vector<16x9xf32> to vector<16x1xf32>
    %69 = vector.broadcast %68 : vector<16x1xf32> to vector<16x256xf32>
    %70 = arith.mulf %69, %64 : vector<16x256xf32>
    %71 = vector.extract_strided_slice %61 {offsets = [0, 3], sizes = [16, 1], strides = [1, 1]} : vector<16x9xf32> to vector<16x1xf32>
    %72 = vector.broadcast %71 : vector<16x1xf32> to vector<16x256xf32>
    %73 = arith.mulf %72, %60 : vector<16x256xf32>
    %74 = arith.addf %70, %73 : vector<16x256xf32>
    %75 = vector.extract_strided_slice %61 {offsets = [0, 6], sizes = [16, 1], strides = [1, 1]} : vector<16x9xf32> to vector<16x1xf32>
    %76 = vector.broadcast %75 : vector<16x1xf32> to vector<16x256xf32>
    %77 = arith.mulf %76, %67 : vector<16x256xf32>
    %78 = arith.addf %74, %77 : vector<16x256xf32>
    %79 = vector.extract_strided_slice %61 {offsets = [0, 1], sizes = [16, 1], strides = [1, 1]} : vector<16x9xf32> to vector<16x1xf32>
    %80 = vector.broadcast %79 : vector<16x1xf32> to vector<16x256xf32>
    %81 = arith.mulf %80, %64 : vector<16x256xf32>
    %82 = vector.extract_strided_slice %61 {offsets = [0, 4], sizes = [16, 1], strides = [1, 1]} : vector<16x9xf32> to vector<16x1xf32>
    %83 = vector.broadcast %82 : vector<16x1xf32> to vector<16x256xf32>
    %84 = arith.mulf %83, %60 : vector<16x256xf32>
    %85 = arith.addf %81, %84 : vector<16x256xf32>
    %86 = vector.extract_strided_slice %61 {offsets = [0, 7], sizes = [16, 1], strides = [1, 1]} : vector<16x9xf32> to vector<16x1xf32>
    %87 = vector.broadcast %86 : vector<16x1xf32> to vector<16x256xf32>
    %88 = arith.mulf %87, %67 : vector<16x256xf32>
    %89 = arith.addf %85, %88 : vector<16x256xf32>
    %90 = vector.extract_strided_slice %61 {offsets = [0, 2], sizes = [16, 1], strides = [1, 1]} : vector<16x9xf32> to vector<16x1xf32>
    %91 = vector.broadcast %90 : vector<16x1xf32> to vector<16x256xf32>
    %92 = arith.mulf %91, %64 : vector<16x256xf32>
    %93 = vector.extract_strided_slice %61 {offsets = [0, 5], sizes = [16, 1], strides = [1, 1]} : vector<16x9xf32> to vector<16x1xf32>
    %94 = vector.broadcast %93 : vector<16x1xf32> to vector<16x256xf32>
    %95 = arith.mulf %94, %60 : vector<16x256xf32>
    %96 = arith.addf %92, %95 : vector<16x256xf32>
    %97 = vector.extract_strided_slice %61 {offsets = [0, 8], sizes = [16, 1], strides = [1, 1]} : vector<16x9xf32> to vector<16x1xf32>
    %98 = vector.broadcast %97 : vector<16x1xf32> to vector<16x256xf32>
    %99 = arith.mulf %98, %67 : vector<16x256xf32>
    %100 = arith.addf %96, %99 : vector<16x256xf32>
    %c1_i32_14 = arith.constant 1 : i32
    %101 = tpu.dynamic_rotate %78 by %c1_i32_14 dim 1 : vector<16x256xf32>, i32 -> vector<16x256xf32>
    %102 = vector.broadcast %2 : vector<1x256xf32> to vector<16x256xf32>
    %103 = arith.mulf %101, %102 : vector<16x256xf32>
    %104 = arith.addf %89, %103 : vector<16x256xf32>
    %c255_i32_15 = arith.constant 255 : i32
    %105 = tpu.dynamic_rotate %100 by %c255_i32_15 dim 1 : vector<16x256xf32>, i32 -> vector<16x256xf32>
    %106 = vector.broadcast %3 : vector<1x256xf32> to vector<16x256xf32>
    %107 = arith.mulf %105, %106 : vector<16x256xf32>
    %108 = arith.addf %104, %107 : vector<16x256xf32>
    %109 = tpu.concatenate %108, %0 in 0 : vector<16x256xf32>, vector<8x256xf32> -> vector<24x256xf32>
    %c0_16 = arith.constant 0 : index
    %c0_17 = arith.constant 0 : index
    %110 = vector.load %arg6[%c0_16, %c0_17] : memref<16x24xf32, #tpu.memory_space<vmem>>, vector<16x24xf32>
    %cst_18 = arith.constant dense<0.000000e+00> : vector<16x256xf32>
    %111 = tpu.matmul %110, %109, %cst_18 {dimension_numbers = #tpu.dot_dimension_numbers<[1], [0], [0], [1], [0, 0, 1, 1], [], []>} : vector<16x24xf32>, vector<24x256xf32>, vector<16x256xf32> -> vector<16x256xf32>
    %c0_19 = arith.constant 0 : index
    %c0_20 = arith.constant 0 : index
    %112 = vector.load %arg7[%c0_19, %c0_20] : memref<16x1xf32, #tpu.memory_space<vmem>>, vector<16x1xf32>
    %113 = vector.broadcast %112 : vector<16x1xf32> to vector<16x256xf32>
    %114 = arith.addf %111, %113 : vector<16x256xf32>
    %cst_21 = arith.constant 0.000000e+00 : f32
    %115 = vector.broadcast %cst_21 : f32 to vector<16x256xf32>
    %116 = arith.maximumf %114, %115 : vector<16x256xf32>
    %c0_22 = arith.constant 0 : index
    %c0_23 = arith.constant 0 : index
    %117 = vector.load %arg8[%c0_22, %c0_23] : memref<16x256xf32, #tpu.memory_space<vmem>>, vector<16x256xf32>
    tpu.vector_store %arg8[%c0_22, %c0_23], %116 {strides = array<i32>} : memref<16x256xf32, #tpu.memory_space<vmem>>, vector<16x256xf32>,
    return
  }
}

</mosaic_0001>

<llo_original>
// kernel: tpu_custom_call.1
$region0: #{tpu_custom_call.1}
  #allocation0 [shape = 'u32[]', space=smem, size = 0x4, offset = 0x4, fixed_abs, tag = 'smem constant byte address 0x4 - core index']
  #allocation1 [shape = 'u32[72,128]{1,0:T(1,128)}', space=vmem, size = 0x9000, scoped, tag = 'internal scratch']
  %s0 = inlined_call_operand.vmem [shape: f32[8,256], index: 0, kind: input, shape index: {}]
  %s1 = inlined_call_operand.vmem [shape: f32[4,256], index: 1, kind: input, shape index: {}]
  %s2 = inlined_call_operand.hbm [shape: f32[8,9], index: 2, kind: input, shape index: {}]
  %s3 = inlined_call_operand.vmem [shape: f32[16,8], index: 3, kind: input, shape index: {}]
  %s4 = inlined_call_operand.vmem [shape: f32[16,1], index: 4, kind: input, shape index: {}]
  %s5 = inlined_call_operand.vmem [shape: f32[16,9], index: 5, kind: input, shape index: {}]
  %s6 = inlined_call_operand.vmem [shape: f32[16,24], index: 6, kind: input, shape index: {}]
  %s7 = inlined_call_operand.vmem [shape: f32[16,1], index: 7, kind: input, shape index: {}]
  %s8 = inlined_call_operand.hbm [shape: f32[16,256], index: 8, kind: output, shape index: {}]
  %s9 = sld [smem:[#allocation0]]
  $region46: #{tpu_custom_call.1} parent=0
    _
  %s11 = ssub.s32 1, %s9
  %s12 = scalar_select 0, %s11, %s9
  $region1: #{tpu_custom_call.1} parent=0
    #allocation2 [shape = 'u8[4096]{0}', space=vmem, size = 0x1000, scoped, tag = 'input window, operand 2, single buffered']
    #allocation3 [shape = 's32[1]{0}', space=sflag, size = 0x4, scoped, tag = 'scoped memory for tpu_custom_call.1']
    #allocation4 [shape = 's32[1]{0}', space=sflag, size = 0x4, scoped, tag = 'scoped memory for tpu_custom_call.1']
    #allocation5 [shape = 'u8[16384]{0}', space=vmem, size = 0x4000, scoped, tag = 'output window, operand 0, single buffered']
    %13 = vsyncpa [#allocation3], 0
    %14 = vsyncpa [#allocation4], 0
    // Predicated region
    $region2: #{tpu_custom_call.1} parent=1 // pred_check
      _
    $region3: #{tpu_custom_call.1} parent=1 // pred_check_branch
      %16 = sbr.rel (0) target = $region5
    $region4: #{tpu_custom_call.1} parent=1 // pred_region
      _
    $region5: #{tpu_custom_call.1} parent=1 // pred_fallthru
      _
    // Predicated region
    $region6: #{tpu_custom_call.1} parent=1 // pred_check
      _
    $region7: #{tpu_custom_call.1} parent=1 // pred_check_branch
      %18 = sbr.rel (0) target = $region9
    $region8: #{tpu_custom_call.1} parent=1 // pred_region
      _
    $region9: #{tpu_custom_call.1} parent=1 // pred_fallthru
      _
    // Predicated region
    $region10: #{tpu_custom_call.1} parent=1 // pred_check
      _
    $region11: #{tpu_custom_call.1} parent=1 // pred_check_branch
      %20 = sbr.rel (0) target = $region13
    $region12: #{tpu_custom_call.1} parent=1 // pred_region
      %22 = vsyncadd [#allocation3], 0
      %s24 = sshll.u32 %s2, 4
      %s25 = int_to_ptr.hbm [resolvable:$true] %s24
      %s26 = sshll.u32 [#allocation2], 4
      %s27 = int_to_ptr.vmem [resolvable:$true] %s26
      %29 = dma.hbm_to_vmem [thread:$0]  %s25, 128, %s27, [#allocation3]
    $region13: #{tpu_custom_call.1} parent=1 // pred_fallthru
      _
    // Predicated region
    $region14: #{tpu_custom_call.1} parent=1 // pred_check
      _
    $region15: #{tpu_custom_call.1} parent=1 // pred_check_branch
      %31 = sbr.rel (0) target = $region17
    $region16: #{tpu_custom_call.1} parent=1 // pred_region
      _
    $region17: #{tpu_custom_call.1} parent=1 // pred_fallthru
      _
    // Predicated region
    $region18: #{tpu_custom_call.1} parent=1 // pred_check
      _
    $region19: #{tpu_custom_call.1} parent=1 // pred_check_branch
      %33 = sbr.rel (0) target = $region21
    $region20: #{tpu_custom_call.1} parent=1 // pred_region
      _
    $region21: #{tpu_custom_call.1} parent=1 // pred_fallthru
      _
    // Predicated region
    $region22: #{tpu_custom_call.1} parent=1 // pred_check
      _
    $region23: #{tpu_custom_call.1} parent=1 // pred_check_branch
      %35 = sbr.rel (0) target = $region25
    $region24: #{tpu_custom_call.1} parent=1 // pred_region
      _
    $region25: #{tpu_custom_call.1} parent=1 // pred_fallthru
      _
    // Predicated region
    $region26: #{tpu_custom_call.1} parent=1 // pred_check
      _
    $region27: #{tpu_custom_call.1} parent=1 // pred_check_branch
      %37 = sbr.rel (0) target = $region29
    $region28: #{tpu_custom_call.1} parent=1 // pred_region
      _
    $region29: #{tpu_custom_call.1} parent=1 // pred_fallthru
      _
    // Predicated region
    $region30: #{tpu_custom_call.1} parent=1 // pred_check
      _
    $region31: #{tpu_custom_call.1} parent=1 // pred_check_branch
      %39 = sbr.rel (0) target = $region33
    $region32: #{tpu_custom_call.1} parent=1 // pred_region
      _
    $region33: #{tpu_custom_call.1} parent=1 // pred_fallthru
      _
    // Predicated region
    $region34: #{tpu_custom_call.1} parent=1 // pred_check
      _
    $region35: #{tpu_custom_call.1} parent=1 // pred_check_branch
      %41 = sbr.rel (0) target = $region37
    $region36: #{tpu_custom_call.1} parent=1 // pred_region
      %43 = dma.done [#allocation3], 128
    $region37: #{tpu_custom_call.1} parent=1 // pred_fallthru
      _
    %v44 = vld [vmem:[%s0] sm:$0xff]
    %v45 = vld [vmem:[%s0 + $0x8] sm:$0xff]
    %v46 = vld [vmem:[%s1] sm:$0xff]
    %v47 = vld [vmem:[#allocation2] sm:$0xff]
    %48 = vrot.lane.b32.xlu0 %v44, 16
    %v49 = vpop.permute.xlu0 %48
    %50 = vrot.lane.b32.xlu0 %v45, 16
    %v51 = vpop.permute.xlu0 %50
    %v52 = vlaneseq
    %v53 = vand.u32 %v52, 127
    %vm54 = vcmp.lt.s32.totalorder %v53, 16
    %v55 = vsel %vm54, %v49, %v51
    %v56 = vsel %vm54, %v51, %v49
    %v58 = vperm.slane %v46, 2
    %v59 = vperm.slane %v46, 6
    %v62 = vperm.slane %v58, 2
    %v63 = vperm.slane %v59, 2
    %v64 = vmul.f32 %v56, %v62
    %v65 = vmul.f32 %v55, %v63
    %66 = vrot.lane.b32.xlu0 %v44, 112
    %v67 = vpop.permute.xlu0 %66
    %68 = vrot.lane.b32.xlu0 %v45, 112
    %v69 = vpop.permute.xlu0 %68
    %vm70 = vcmp.lt.s32.totalorder %v53, 112
    %v71 = vsel %vm70, %v67, %v69
    %v72 = vsel %vm70, %v69, %v67
    %v73 = vperm.slane %v46, 3
    %v74 = vperm.slane %v46, 7
    %v77 = vperm.slane %v73, 3
    %v78 = vperm.slane %v74, 3
    %v79 = vmul.f32 %v71, %v77
    %v80 = vmul.f32 %v72, %v78
    %82 = vset.pattern.permute.xlu0 0
    %83 = vperm.xlu0 %82, %v47
    %v84 = vpop.permute.xlu0 %83
    %v86 = vmul.f32 %v84, %v64
    %v87 = vmul.f32 %v84, %v65
    %88 = vset.pattern.permute.xlu0 3
    %89 = vperm.xlu0 %88, %v47
    %v90 = vpop.permute.xlu0 %89
    %v92 = vmul.f32 %v90, %v44
    %v93 = vmul.f32 %v90, %v45
    %v94 = vadd.f32 %v86, %v92
    %v95 = vadd.f32 %v87, %v93
    %96 = vset.pattern.permute.xlu0 6
    %97 = vperm.xlu0 %96, %v47
    %v98 = vpop.permute.xlu0 %97
    %v100 = vmul.f32 %v98, %v79
    %v101 = vmul.f32 %v98, %v80
    %v102 = vadd.f32 %v94, %v100
    %v103 = vadd.f32 %v95, %v101
    %104 = vset.pattern.permute.xlu0 1
    %105 = vperm.xlu0 %104, %v47
    %v106 = vpop.permute.xlu0 %105
    %v108 = vmul.f32 %v106, %v64
    %v109 = vmul.f32 %v106, %v65
    %110 = vset.pattern.permute.xlu0 4
    %111 = vperm.xlu0 %110, %v47
    %v112 = vpop.permute.xlu0 %111
    %v114 = vmul.f32 %v112, %v44
    %v115 = vmul.f32 %v112, %v45
    %v116 = vadd.f32 %v108, %v114
    %v117 = vadd.f32 %v109, %v115
    %118 = vset.pattern.permute.xlu0 7
    %119 = vperm.xlu0 %118, %v47
    %v120 = vpop.permute.xlu0 %119
    %v122 = vmul.f32 %v120, %v79
    %v123 = vmul.f32 %v120, %v80
    %v124 = vadd.f32 %v116, %v122
    %v125 = vadd.f32 %v117, %v123
    %126 = vset.pattern.permute.xlu0 2
    %127 = vperm.xlu0 %126, %v47
    %v128 = vpop.permute.xlu0 %127
    %v130 = vmul.f32 %v128, %v64
    %v131 = vmul.f32 %v128, %v65
    %132 = vset.pattern.permute.xlu0 5
    %133 = vperm.xlu0 %132, %v47
    %v134 = vpop.permute.xlu0 %133
    %v136 = vmul.f32 %v134, %v44
    %v137 = vmul.f32 %v134, %v45
    %v138 = vadd.f32 %v130, %v136
    %v139 = vadd.f32 %v131, %v137
    %140 = vset.pattern.permute.xlu0 8
    %141 = vperm.xlu0 %140, %v47
    %v142 = vpop.permute.xlu0 %141
    %v144 = vmul.f32 %v142, %v79
    %v145 = vmul.f32 %v142, %v80
    %v146 = vadd.f32 %v138, %v144
    %v147 = vadd.f32 %v139, %v145
    %148 = vrot.lane.b32.xlu0 %v102, 1
    %v149 = vpop.permute.xlu0 %148
    %150 = vrot.lane.b32.xlu0 %v103, 1
    %v151 = vpop.permute.xlu0 %150
    %vm152 = vcmp.lt.s32.totalorder %v53, 1
    %v153 = vsel %vm152, %v149, %v151
    %v154 = vsel %vm152, %v151, %v149
    %v155 = vperm.slane %v46, 0
    %v156 = vperm.slane %v46, 4
    %v159 = vperm.slane %v155, 0
    %v160 = vperm.slane %v156, 0
    %v161 = vmul.f32 %v154, %v159
    %v162 = vmul.f32 %v153, %v160
    %v163 = vadd.f32 %v124, %v161
    %v164 = vadd.f32 %v125, %v162
    %165 = vrot.lane.b32.xlu0 %v146, 127
    %v166 = vpop.permute.xlu0 %165
    %167 = vrot.lane.b32.xlu0 %v147, 127
    %v168 = vpop.permute.xlu0 %167
    %vm169 = vcmp.lt.s32.totalorder %v53, 127
    %v170 = vsel %vm169, %v166, %v168
    %v171 = vsel %vm169, %v168, %v166
    %v172 = vperm.slane %v46, 1
    %v173 = vperm.slane %v46, 5
    %v176 = vperm.slane %v172, 1
    %v177 = vperm.slane %v173, 1
    %v178 = vmul.f32 %v170, %v176
    %v179 = vmul.f32 %v171, %v177
    %v180 = vadd.f32 %v163, %v178
    %v181 = vadd.f32 %v164, %v179
    %v182 = vld [vmem:[%s3] sm:$0xff]
    %v183 = vld [vmem:[%s3 + $0x8] sm:$0xff]
    %v184 = vld [vmem:[%s4] sm:$0xff]
    %v185 = vld [vmem:[%s4 + $0x8] sm:$0xff]
    %187 = vset.pattern.permute.xlu0 0
    %188 = vperm.xlu0 %187, %v184
    %v189 = vpop.permute.xlu0 %188
    %192 = vset.pattern.permute.xlu0 0
    %193 = vperm.xlu0 %192, %v185
    %v194 = vpop.permute.xlu0 %193
    %vm196 = vcmask 64512
    %v198 = vsel %vm196, %v182, 0
    %v201 = vsel %vm196, %v183, 0
    %203 = vmatpush.msra.mxu0 0.0
    %204 = vmatpush.msra.mxu0 0.0
    %205 = vmatpush.msra.mxu0 0.0
    %206 = vmatpush.msra.mxu0 0.0
    %207 = vmatpush.msra.mxu0 0.0
    %208 = vmatpush.msra.mxu0 0.0
    %209 = vmatpush.msra.mxu0 0.0
    %210 = vmatpush.msra.mxu0 0.0
    %211 = vmatpush.msra.mxu0 0.0
    %212 = vmatpush.msra.mxu0 0.0
    %213 = vmatpush.msra.mxu0 0.0
    %214 = vmatpush.msra.mxu0 0.0
    %215 = vmatpush.msra.mxu0 0.0
    %216 = vmatpush.msra.mxu0 0.0
    %217 = vmatpush.msra.mxu0 0.0
    %218 = vmatpush.msra.mxu0 %v180
    %219 = vmatmul.f32.gmra.mxu0 %v198
    %v220 = vpop.f32.mrf.mxu0
    %v221 = vadd.f32 %v189, %v220
    %222 = vmatmul.f32.gmra.mxu0 %v201
    %v223 = vpop.f32.mrf.mxu0
    %v224 = vadd.f32 %v194, %v223
    %225 = vdwg.mxu0
    %226 = vmatpush.msra.mxu0 0.0
    %227 = vmatpush.msra.mxu0 0.0
    %228 = vmatpush.msra.mxu0 0.0
    %229 = vmatpush.msra.mxu0 0.0
    %230 = vmatpush.msra.mxu0 0.0
    %231 = vmatpush.msra.mxu0 0.0
    %232 = vmatpush.msra.mxu0 0.0
    %233 = vmatpush.msra.mxu0 0.0
    %234 = vmatpush.msra.mxu0 0.0
    %235 = vmatpush.msra.mxu0 0.0
    %236 = vmatpush.msra.mxu0 0.0
    %237 = vmatpush.msra.mxu0 0.0
    %238 = vmatpush.msra.mxu0 0.0
    %239 = vmatpush.msra.mxu0 0.0
    %240 = vmatpush.msra.mxu0 0.0
    %241 = vmatpush.msra.mxu0 %v181
    %242 = vmatmul.f32.gmra.mxu0 %v198
    %v243 = vpop.f32.mrf.mxu0
    %v244 = vadd.f32 %v189, %v243
    %245 = vmatmul.f32.gmra.mxu0 %v201
    %v246 = vpop.f32.mrf.mxu0
    %v247 = vadd.f32 %v194, %v246
    %248 = vdwg.mxu0
    %v249 = vmax.f32 %v221, 0.0
    %v250 = vmax.f32 %v244, 0.0
    %v251 = vmax.f32 %v224, 0.0
    %v252 = vmax.f32 %v247, 0.0
    %v253 = vld [vmem:[%s5] sm:$0xff]
    %v254 = vld [vmem:[%s5 + $0x8] sm:$0xff]
    %255 = vrot.lane.b32.xlu0 %v249, 16
    %v256 = vpop.permute.xlu0 %255
    %257 = vrot.lane.b32.xlu0 %v251, 16
    %v258 = vpop.permute.xlu0 %257
    %259 = vrot.lane.b32.xlu0 %v250, 16
    %v260 = vpop.permute.xlu0 %259
    %261 = vrot.lane.b32.xlu0 %v252, 16
    %v262 = vpop.permute.xlu0 %261
    %v263 = vsel %vm54, %v256, %v260
    %v264 = vsel %vm54, %v258, %v262
    %v265 = vsel %vm54, %v260, %v256
    %v266 = vsel %vm54, %v262, %v258
    %v267 = vmul.f32 %v265, %v62
    %v268 = vmul.f32 %v263, %v63
    %v269 = vmul.f32 %v266, %v62
    %v270 = vmul.f32 %v264, %v63
    %271 = vrot.lane.b32.xlu0 %v249, 112
    %v272 = vpop.permute.xlu0 %271
    %273 = vrot.lane.b32.xlu0 %v251, 112
    %v274 = vpop.permute.xlu0 %273
    %275 = vrot.lane.b32.xlu0 %v250, 112
    %v276 = vpop.permute.xlu0 %275
    %277 = vrot.lane.b32.xlu0 %v252, 112
    %v278 = vpop.permute.xlu0 %277
    %v279 = vsel %vm70, %v272, %v276
    %v280 = vsel %vm70, %v274, %v278
    %v281 = vsel %vm70, %v276, %v272
    %v282 = vsel %vm70, %v278, %v274
    %v283 = vmul.f32 %v279, %v77
    %v284 = vmul.f32 %v281, %v78
    %v285 = vmul.f32 %v280, %v77
    %v286 = vmul.f32 %v282, %v78
    %288 = vset.pattern.permute.xlu0 0
    %289 = vperm.xlu0 %288, %v253
    %v290 = vpop.permute.xlu0 %289
    %293 = vset.pattern.permute.xlu0 0
    %294 = vperm.xlu0 %293, %v254
    %v295 = vpop.permute.xlu0 %294
    %v297 = vmul.f32 %v290, %v267
    %v298 = vmul.f32 %v290, %v268
    %v299 = vmul.f32 %v295, %v269
    %v300 = vmul.f32 %v295, %v270
    %301 = vset.pattern.permute.xlu0 3
    %302 = vperm.xlu0 %301, %v253
    %v303 = vpop.permute.xlu0 %302
    %305 = vset.pattern.permute.xlu0 3
    %306 = vperm.xlu0 %305, %v254
    %v307 = vpop.permute.xlu0 %306
    %v309 = vmul.f32 %v303, %v249
    %v310 = vmul.f32 %v303, %v250
    %v311 = vmul.f32 %v307, %v251
    %v312 = vmul.f32 %v307, %v252
    %v313 = vadd.f32 %v297, %v309
    %v314 = vadd.f32 %v298, %v310
    %v315 = vadd.f32 %v299, %v311
    %v316 = vadd.f32 %v300, %v312
    %317 = vset.pattern.permute.xlu0 6
    %318 = vperm.xlu0 %317, %v253
    %v319 = vpop.permute.xlu0 %318
    %321 = vset.pattern.permute.xlu0 6
    %322 = vperm.xlu0 %321, %v254
    %v323 = vpop.permute.xlu0 %322
    %v325 = vmul.f32 %v319, %v283
    %v326 = vmul.f32 %v319, %v284
    %v327 = vmul.f32 %v323, %v285
    %v328 = vmul.f32 %v323, %v286
    %v329 = vadd.f32 %v313, %v325
    %v330 = vadd.f32 %v314, %v326
    %v331 = vadd.f32 %v315, %v327
    %v332 = vadd.f32 %v316, %v328
    %333 = vset.pattern.permute.xlu0 1
    %334 = vperm.xlu0 %333, %v253
    %v335 = vpop.permute.xlu0 %334
    %337 = vset.pattern.permute.xlu0 1
    %338 = vperm.xlu0 %337, %v254
    %v339 = vpop.permute.xlu0 %338
    %v341 = vmul.f32 %v335, %v267
    %v342 = vmul.f32 %v335, %v268
    %v343 = vmul.f32 %v339, %v269
    %v344 = vmul.f32 %v339, %v270
    %345 = vset.pattern.permute.xlu0 4
    %346 = vperm.xlu0 %345, %v253
    %v347 = vpop.permute.xlu0 %346
    %349 = vset.pattern.permute.xlu0 4
    %350 = vperm.xlu0 %349, %v254
    %v351 = vpop.permute.xlu0 %350
    %v353 = vmul.f32 %v347, %v249
    %v354 = vmul.f32 %v347, %v250
    %v355 = vmul.f32 %v351, %v251
    %v356 = vmul.f32 %v351, %v252
    %v357 = vadd.f32 %v341, %v353
    %v358 = vadd.f32 %v342, %v354
    %v359 = vadd.f32 %v343, %v355
    %v360 = vadd.f32 %v344, %v356
    %361 = vset.pattern.permute.xlu0 7
    %362 = vperm.xlu0 %361, %v253
    %v363 = vpop.permute.xlu0 %362
    %365 = vset.pattern.permute.xlu0 7
    %366 = vperm.xlu0 %365, %v254
    %v367 = vpop.permute.xlu0 %366
    %v369 = vmul.f32 %v363, %v283
    %v370 = vmul.f32 %v363, %v284
    %v371 = vmul.f32 %v367, %v285
    %v372 = vmul.f32 %v367, %v286
    %v373 = vadd.f32 %v357, %v369
    %v374 = vadd.f32 %v358, %v370
    %v375 = vadd.f32 %v359, %v371
    %v376 = vadd.f32 %v360, %v372
    %377 = vset.pattern.permute.xlu0 2
    %378 = vperm.xlu0 %377, %v253
    %v379 = vpop.permute.xlu0 %378
    %381 = vset.pattern.permute.xlu0 2
    %382 = vperm.xlu0 %381, %v254
    %v383 = vpop.permute.xlu0 %382
    %v385 = vmul.f32 %v379, %v267
    %v386 = vmul.f32 %v379, %v268
    %v387 = vmul.f32 %v383, %v269
    %v388 = vmul.f32 %v383, %v270
    %389 = vset.pattern.permute.xlu0 5
    %390 = vperm.xlu0 %389, %v253
    %v391 = vpop.permute.xlu0 %390
    %393 = vset.pattern.permute.xlu0 5
    %394 = vperm.xlu0 %393, %v254
    %v395 = vpop.permute.xlu0 %394
    %v397 = vmul.f32 %v391, %v249
    %v398 = vmul.f32 %v391, %v250
    %v399 = vmul.f32 %v395, %v251
    %v400 = vmul.f32 %v395, %v252
    %v401 = vadd.f32 %v385, %v397
    %v402 = vadd.f32 %v386, %v398
    %v403 = vadd.f32 %v387, %v399
    %v404 = vadd.f32 %v388, %v400
    %405 = vset.pattern.permute.xlu0 8
    %406 = vperm.xlu0 %405, %v253
    %v407 = vpop.permute.xlu0 %406
    %409 = vset.pattern.permute.xlu0 8
    %410 = vperm.xlu0 %409, %v254
    %v411 = vpop.permute.xlu0 %410
    %v413 = vmul.f32 %v407, %v283
    %v414 = vmul.f32 %v407, %v284
    %v415 = vmul.f32 %v411, %v285
    %v416 = vmul.f32 %v411, %v286
    %v417 = vadd.f32 %v401, %v413
    %v418 = vadd.f32 %v402, %v414
    %v419 = vadd.f32 %v403, %v415
    %v420 = vadd.f32 %v404, %v416
    %421 = vrot.lane.b32.xlu0 %v329, 1
    %v422 = vpop.permute.xlu0 %421
    %423 = vrot.lane.b32.xlu0 %v331, 1
    %v424 = vpop.permute.xlu0 %423
    %425 = vrot.lane.b32.xlu0 %v330, 1
    %v426 = vpop.permute.xlu0 %425
    %427 = vrot.lane.b32.xlu0 %v332, 1
    %v428 = vpop.permute.xlu0 %427
    %v429 = vsel %vm152, %v422, %v426
    %v430 = vsel %vm152, %v424, %v428
    %v431 = vsel %vm152, %v426, %v422
    %v432 = vsel %vm152, %v428, %v424
    %v433 = vmul.f32 %v431, %v159
    %v434 = vmul.f32 %v429, %v160
    %v435 = vmul.f32 %v432, %v159
    %v436 = vmul.f32 %v430, %v160
    %v437 = vadd.f32 %v373, %v433
    %v438 = vadd.f32 %v374, %v434
    %v439 = vadd.f32 %v375, %v435
    %v440 = vadd.f32 %v376, %v436
    %441 = vrot.lane.b32.xlu0 %v417, 127
    %v442 = vpop.permute.xlu0 %441
    %443 = vrot.lane.b32.xlu0 %v419, 127
    %v444 = vpop.permute.xlu0 %443
    %445 = vrot.lane.b32.xlu0 %v418, 127
    %v446 = vpop.permute.xlu0 %445
    %447 = vrot.lane.b32.xlu0 %v420, 127
    %v448 = vpop.permute.xlu0 %447
    %v449 = vsel %vm169, %v442, %v446
    %v450 = vsel %vm169, %v444, %v448
    %v451 = vsel %vm169, %v446, %v442
    %v452 = vsel %vm169, %v448, %v444
    %v453 = vmul.f32 %v449, %v176
    %v454 = vmul.f32 %v451, %v177
    %v455 = vmul.f32 %v450, %v176
    %v456 = vmul.f32 %v452, %v177
    %v457 = vadd.f32 %v437, %v453
    %v458 = vadd.f32 %v438, %v454
    %v459 = vadd.f32 %v439, %v455
    %v460 = vadd.f32 %v440, %v456
    %v461 = vld [vmem:[%s6] sm:$0xff]
    %v462 = vld [vmem:[%s6 + $0x8] sm:$0xff]
    %v463 = vld [vmem:[%s7] sm:$0xff]
    %v464 = vld [vmem:[%s7 + $0x8] sm:$0xff]
    %466 = vset.pattern.permute.xlu0 0
    %467 = vperm.xlu0 %466, %v463
    %v468 = vpop.permute.xlu0 %467
    %471 = vset.pattern.permute.xlu0 0
    %472 = vperm.xlu0 %471, %v464
    %v473 = vpop.permute.xlu0 %472
    %vm475 = vcmask 195584
    %v477 = vsel %vm475, %v461, 0
    %v480 = vsel %vm475, %v462, 0
    %482 = vmatpush.msra.mxu0 0.0
    %483 = vmatpush.msra.mxu0 0.0
    %484 = vmatpush.msra.mxu0 0.0
    %485 = vmatpush.msra.mxu0 0.0
    %486 = vmatpush.msra.mxu0 0.0
    %487 = vmatpush.msra.mxu0 0.0
    %488 = vmatpush.msra.mxu0 0.0
    %489 = vmatpush.msra.mxu0 0.0
    %490 = vmatpush.msra.mxu0 0.0
    %491 = vmatpush.msra.mxu0 0.0
    %492 = vmatpush.msra.mxu0 0.0
    %493 = vmatpush.msra.mxu0 0.0
    %494 = vmatpush.msra.mxu0 0.0
    %495 = vmatpush.msra.mxu0 %v44
    %496 = vmatpush.msra.mxu0 %v459
    %497 = vmatpush.msra.mxu0 %v457
    %498 = vmatmul.f32.gmra.mxu0 %v477
    %v499 = vpop.f32.mrf.mxu0
    %v500 = vadd.f32 %v468, %v499
    %501 = vmatmul.f32.gmra.mxu0 %v480
    %v502 = vpop.f32.mrf.mxu0
    %v503 = vadd.f32 %v473, %v502
    %504 = vdwg.mxu0
    %505 = vmatpush.msra.mxu0 0.0
    %506 = vmatpush.msra.mxu0 0.0
    %507 = vmatpush.msra.mxu0 0.0
    %508 = vmatpush.msra.mxu0 0.0
    %509 = vmatpush.msra.mxu0 0.0
    %510 = vmatpush.msra.mxu0 0.0
    %511 = vmatpush.msra.mxu0 0.0
    %512 = vmatpush.msra.mxu0 0.0
    %513 = vmatpush.msra.mxu0 0.0
    %514 = vmatpush.msra.mxu0 0.0
    %515 = vmatpush.msra.mxu0 0.0
    %516 = vmatpush.msra.mxu0 0.0
    %517 = vmatpush.msra.mxu0 0.0
    %518 = vmatpush.msra.mxu0 %v45
    %519 = vmatpush.msra.mxu0 %v460
    %520 = vmatpush.msra.mxu0 %v458
    %521 = vmatmul.f32.gmra.mxu0 %v477
    %v522 = vpop.f32.mrf.mxu0
    %v523 = vadd.f32 %v468, %v522
    %524 = vmatmul.f32.gmra.mxu0 %v480
    %v525 = vpop.f32.mrf.mxu0
    %v526 = vadd.f32 %v473, %v525
    %527 = vdwg.mxu0
    %v528 = vmax.f32 %v500, 0.0
    %v529 = vmax.f32 %v523, 0.0
    %v530 = vmax.f32 %v503, 0.0
    %v531 = vmax.f32 %v526, 0.0
    %532 = vst [vmem:[#allocation5] sm:$0xff] %v528
    %533 = vst [vmem:[#allocation5 + $0x8] sm:$0xff] %v529
    %534 = vst [vmem:[#allocation5 + $0x10] sm:$0xff] %v530
    %535 = vst [vmem:[#allocation5 + $0x18] sm:$0xff] %v531
    // Predicated region
    $region38: #{tpu_custom_call.1} parent=1 // pred_check
      _
    $region39: #{tpu_custom_call.1} parent=1 // pred_check_branch
      %537 = sbr.rel (0) target = $region41
    $region40: #{tpu_custom_call.1} parent=1 // pred_region
      %539 = vsyncadd [#allocation4], 0
      %s540 = sshll.u32 [#allocation5], 4
      %s541 = int_to_ptr.vmem [resolvable:$true] %s540
      %s542 = sshll.u32 %s8, 4
      %s543 = int_to_ptr.hbm [resolvable:$true] %s542
      %548 = dma.vmem_to_hbm [thread:$0]  %s541, 512, %s543, [#allocation4], 256, 256, 16
    $region41: #{tpu_custom_call.1} parent=1 // pred_fallthru
      _
    // Predicated region
    $region42: #{tpu_custom_call.1} parent=1 // pred_check
      _
    $region43: #{tpu_custom_call.1} parent=1 // pred_check_branch
      %550 = sbr.rel (0) target = $region45
    $region44: #{tpu_custom_call.1} parent=1 // pred_region
      %552 = dma.done [#allocation4], 512
    $region45: #{tpu_custom_call.1} parent=1 // pred_fallthru
      _
    %553 = vsyncpa [#allocation3], 1
    %554 = vsyncpa [#allocation4], 1

</llo_original>
